<compile_context>
chip_gen: v7x
topology: tpu7x:2x2x1
jax: 0.10.0
libtpu: 0.0.40
codegen_flags: <defaults>
</compile_context>

<pallas_src>
import functools

import jax
import jax.numpy as jnp
from jax.experimental import pallas as pl
from jax.experimental.pallas import tpu as pltpu


def _round_up(n, m):
    return (n + m - 1) // m * m


def _policy_kernel(x_ref, lin1_ref, wheads_ref, out_ref, *, num_actions, state_size):
    TB = x_ref.shape[0]
    F = state_size

    x = x_ref[...]                       # [TB, F]
    lin1 = lin1_ref[...]                 # [8, 128]: rows 0..F-1 = W1, row F = b1,
                                         #            row F+1 = (ba|bv|0...) head bias

    # ---- layer 1 on the VPU: K=F is tiny, skip an MXU round trip ----------
    h = lin1[F:F + 1, :]                 # b1, [1,128] -> broadcasts on first add
    for f in range(F):                   # statically unrolled: F mul-adds on [TB,128]
        h = h + x[:, f:f + 1] * lin1[f:f + 1, :]
    h = jnp.maximum(h, 0.0)              # ReLU, [TB, 128]

    # ---- fused heads: ONE MXU matmul, lane-dense [TB,128] result ----------
    logits = jnp.dot(h, wheads_ref[...], preferred_element_type=jnp.float32)
    logits = logits + lin1[F + 1:F + 2, :]          # add (ba | bv | 0-padding)

    lane = jax.lax.broadcasted_iota(jnp.int32, logits.shape, 1)
    is_action = lane < num_actions

    # masked, max-stabilized softmax over the action lanes only
    masked = jnp.where(is_action, logits, jnp.float32(-1e30))
    m = jnp.max(masked, axis=-1, keepdims=True)
    e = jnp.exp(masked - m)                          # zero outside action lanes
    s = jnp.sum(e, axis=-1, keepdims=True)
    r = pl.reciprocal(s, approx=True)                # EUP slot
    r = r * (2.0 - s * r)                            # 1 Newton step -> ~f32 accuracy
    probs = e * r

    value = jnp.where(lane == num_actions, logits, 0.0)   # value in lane `num_actions`

    # single unmasked lane-dense store: lanes 0..A-1 = probs, lane A = value, rest 0
    out_ref[...] = probs + value


def policy_forward(x, w1, b1, wa, ba, wv, bv, *, block_b=512):
    """probs, value for a batch of states. x: [B, F] row-major (nn.Linear layout)."""
    B, F = x.shape
    H = w1.shape[1]          # 128
    A = wa.shape[1]          # 2 actions
    V = wv.shape[1]          # 1 value
    OUT_W = 128              # lane-dense output slab width
    assert H == 128 and A + V <= OUT_W

    # ---- pack parameters into 2 buffers (cuts DMA count) -------------------
    R1 = _round_up(F + 2, 8)                         # 8 rows for F=4
    lin1 = jnp.zeros((R1, H), jnp.float32)
    lin1 = lin1.at[0:F, :].set(w1)                   # rows 0..F-1 : W1
    lin1 = lin1.at[F, :].set(b1.reshape(H))          # row F       : b1
    lin1 = lin1.at[F + 1, 0:A].set(ba.reshape(A))    # row F+1     : ba | bv | 0
    lin1 = lin1.at[F + 1, A:A + V].set(bv.reshape(V))

    wheads = jnp.zeros((H, OUT_W), jnp.float32)      # [Wa | Wv | zero pad]
    wheads = wheads.at[:, 0:A].set(wa)
    wheads = wheads.at[:, A:A + V].set(wv)

    # ---- batch tiling -------------------------------------------------------
    TB = min(block_b, _round_up(B, 8))               # multiple of 8 sublanes
    B_pad = _round_up(B, TB)
    if B_pad != B:
        x = jnp.pad(x, ((0, B_pad - B), (0, 0)))
    grid = (B_pad // TB,)

    out = pl.pallas_call(
        functools.partial(_policy_kernel, num_actions=A, state_size=F),
        out_shape=jax.ShapeDtypeStruct((B_pad, OUT_W), jnp.float32),
        grid=grid,
        in_specs=[
            pl.BlockSpec((TB, F), lambda i: (i, 0)),        # streamed batch tile
            pl.BlockSpec((R1, H), lambda i: (0, 0)),        # resident layer-1 slab
            pl.BlockSpec((H, OUT_W), lambda i: (0, 0)),     # resident fused heads
        ],
        out_specs=pl.BlockSpec((TB, OUT_W), lambda i: (i, 0)),
        compiler_params=pltpu.CompilerParams(
            dimension_semantics=("parallel",)),             # v7x: shard over 2 TCs
    )(x, lin1, wheads)

    probs = out[:B, 0:A]
    value = out[:B, A:A + V]
    return probs, value


def init_params(key, state_size=4, hidden=128):
    # PyTorch-style uniform(-1/sqrt(fan_in), 1/sqrt(fan_in)) init.
    ks = jax.random.split(key, 6)

    def lin(kw, kb, fan_in, fan_out):
        bound = 1.0 / jnp.sqrt(jnp.float32(fan_in))
        w = jax.random.uniform(kw, (fan_in, fan_out), jnp.float32, -bound, bound)
        b = jax.random.uniform(kb, (1, fan_out), jnp.float32, -bound, bound)
        return w, b

    w1, b1 = lin(ks[0], ks[1], state_size, hidden)   # affine1
    wa, ba = lin(ks[2], ks[3], hidden, 2)            # action_head
    wv, bv = lin(ks[4], ks[5], hidden, 1)            # value_head
    return w1, b1, wa, ba, wv, bv


if __name__ == "__main__":
    key = jax.random.PRNGKey(0)
    k_params, k_x = jax.random.split(key)

    state_size = 4      # CartPole-v1 observation dim
    batch = 8

    w1, b1, wa, ba, wv, bv = init_params(k_params, state_size=state_size)
    x = jax.random.normal(k_x, (batch, state_size), jnp.float32)

    probs, value = policy_forward(x, w1, b1, wa, ba, wv, bv)
    probs = jax.block_until_ready(probs)
    value = jax.block_until_ready(value)

    # Sanity check against pure-JAX reference.
    h_ref = jnp.maximum(x @ w1 + b1, 0.0)
    probs_ref = jax.nn.softmax(h_ref @ wa + ba, axis=-1)
    value_ref = h_ref @ wv + bv
    assert probs.shape == (batch, 2) and value.shape == (batch, 1)
    assert jnp.allclose(probs, probs_ref, atol=1e-5)
    assert jnp.allclose(value, value_ref, atol=1e-5)
    assert jnp.allclose(jnp.sum(probs, axis=-1), 1.0, atol=1e-5)

    print("KERNEL_OK")
</pallas_src>

<mosaic_0001>
module attributes {stable_mosaic.version = 11 : i64} {
  func.func @_policy_kernel(%arg0: i32, %arg1: memref<8x4xf32, #tpu.memory_space<vmem>>, %arg2: memref<8x128xf32, #tpu.memory_space<vmem>>, %arg3: memref<128x128xf32, #tpu.memory_space<vmem>>, %arg4: memref<8x128xf32, #tpu.memory_space<vmem>>) attributes {dimension_semantics = [#tpu.dimension_semantics<parallel>], iteration_bounds = array<i64: 1>, scalar_prefetch = 0 : i64, scratch_operands = 0 : i64, tpu.core_type = #tpu.core_type<tc>, window_params = [{transform_indices = @transform_0, window_bounds = array<i64: 8, 4>}, {pipeline_mode = #tpu.pipeline_mode<synchronous>, transform_indices = @transform_1, window_bounds = array<i64: 8, 128>}, {pipeline_mode = #tpu.pipeline_mode<synchronous>, transform_indices = @transform_2, window_bounds = array<i64: 128, 128>}, {transform_indices = @transform_3, window_bounds = array<i64: 8, 128>}]} {
    %c0 = arith.constant 0 : index
    %c0_0 = arith.constant 0 : index
    %0 = vector.load %arg1[%c0, %c0_0] : memref<8x4xf32, #tpu.memory_space<vmem>>, vector<8x4xf32>
    %c0_1 = arith.constant 0 : index
    %c0_2 = arith.constant 0 : index
    %1 = vector.load %arg2[%c0_1, %c0_2] : memref<8x128xf32, #tpu.memory_space<vmem>>, vector<8x128xf32>
    %2 = vector.extract_strided_slice %1 {offsets = [4, 0], sizes = [1, 128], strides = [1, 1]} : vector<8x128xf32> to vector<1x128xf32>
    %3 = vector.extract_strided_slice %0 {offsets = [0, 0], sizes = [8, 1], strides = [1, 1]} : vector<8x4xf32> to vector<8x1xf32>
    %4 = vector.extract_strided_slice %1 {offsets = [0, 0], sizes = [1, 128], strides = [1, 1]} : vector<8x128xf32> to vector<1x128xf32>
    %5 = vector.broadcast %3 : vector<8x1xf32> to vector<8x128xf32>
    %6 = vector.broadcast %4 : vector<1x128xf32> to vector<8x128xf32>
    %7 = arith.mulf %5, %6 : vector<8x128xf32>
    %8 = vector.broadcast %2 : vector<1x128xf32> to vector<8x128xf32>
    %9 = arith.addf %8, %7 : vector<8x128xf32>
    %10 = vector.extract_strided_slice %0 {offsets = [0, 1], sizes = [8, 1], strides = [1, 1]} : vector<8x4xf32> to vector<8x1xf32>
    %11 = vector.extract_strided_slice %1 {offsets = [1, 0], sizes = [1, 128], strides = [1, 1]} : vector<8x128xf32> to vector<1x128xf32>
    %12 = vector.broadcast %10 : vector<8x1xf32> to vector<8x128xf32>
    %13 = vector.broadcast %11 : vector<1x128xf32> to vector<8x128xf32>
    %14 = arith.mulf %12, %13 : vector<8x128xf32>
    %15 = arith.addf %9, %14 : vector<8x128xf32>
    %16 = vector.extract_strided_slice %0 {offsets = [0, 2], sizes = [8, 1], strides = [1, 1]} : vector<8x4xf32> to vector<8x1xf32>
    %17 = vector.extract_strided_slice %1 {offsets = [2, 0], sizes = [1, 128], strides = [1, 1]} : vector<8x128xf32> to vector<1x128xf32>
    %18 = vector.broadcast %16 : vector<8x1xf32> to vector<8x128xf32>
    %19 = vector.broadcast %17 : vector<1x128xf32> to vector<8x128xf32>
    %20 = arith.mulf %18, %19 : vector<8x128xf32>
    %21 = arith.addf %15, %20 : vector<8x128xf32>
    %22 = vector.extract_strided_slice %0 {offsets = [0, 3], sizes = [8, 1], strides = [1, 1]} : vector<8x4xf32> to vector<8x1xf32>
    %23 = vector.extract_strided_slice %1 {offsets = [3, 0], sizes = [1, 128], strides = [1, 1]} : vector<8x128xf32> to vector<1x128xf32>
    %24 = vector.broadcast %22 : vector<8x1xf32> to vector<8x128xf32>
    %25 = vector.broadcast %23 : vector<1x128xf32> to vector<8x128xf32>
    %26 = arith.mulf %24, %25 : vector<8x128xf32>
    %27 = arith.addf %21, %26 : vector<8x128xf32>
    %cst = arith.constant 0.000000e+00 : f32
    %28 = vector.broadcast %cst : f32 to vector<8x128xf32>
    %29 = arith.maximumf %27, %28 : vector<8x128xf32>
    %c0_3 = arith.constant 0 : index
    %c0_4 = arith.constant 0 : index
    %30 = vector.load %arg3[%c0_3, %c0_4] : memref<128x128xf32, #tpu.memory_space<vmem>>, vector<128x128xf32>
    %cst_5 = arith.constant dense<0.000000e+00> : vector<8x128xf32>
    %31 = tpu.matmul %29, %30, %cst_5 {dimension_numbers = #tpu.dot_dimension_numbers<[1], [0], [0], [1], [0, 0, 1, 1], [], []>} : vector<8x128xf32>, vector<128x128xf32>, vector<8x128xf32> -> vector<8x128xf32>
    %32 = vector.extract_strided_slice %1 {offsets = [5, 0], sizes = [1, 128], strides = [1, 1]} : vector<8x128xf32> to vector<1x128xf32>
    %33 = vector.broadcast %32 : vector<1x128xf32> to vector<8x128xf32>
    %34 = arith.addf %31, %33 : vector<8x128xf32>
    %35 = tpu.iota {dimensions = array<i32: 1>} : vector<8x128xi32>
    %c2_i32 = arith.constant 2 : i32
    %36 = vector.broadcast %c2_i32 : i32 to vector<8x128xi32>
    %37 = arith.cmpi slt, %35, %36 : vector<8x128xi32>
    %cst_6 = arith.constant -1.000000e+30 : f32
    %38 = vector.broadcast %cst_6 : f32 to vector<8x128xf32>
    %39 = arith.select %37, %34, %38 : vector<8x128xi1>, vector<8x128xf32>
    %cst_7 = arith.constant dense<0xFF800000> : vector<8xf32>
    %40 = vector.multi_reduction <maximumf>, %39, %cst_7 [1] : vector<8x128xf32> to vector<8xf32>
    %41 = vector.shape_cast %40 : vector<8xf32> to vector<8x1xf32>
    %42 = vector.broadcast %41 : vector<8x1xf32> to vector<8x128xf32>
    %43 = arith.subf %39, %42 : vector<8x128xf32>
    %44 = math.exp %43 : vector<8x128xf32>
    %cst_8 = arith.constant dense<0.000000e+00> : vector<8xf32>
    %45 = vector.multi_reduction <add>, %44, %cst_8 [1] : vector<8x128xf32> to vector<8xf32>
    %46 = vector.shape_cast %45 : vector<8xf32> to vector<8x1xf32>
    %47 = tpu.reciprocal %46 {approx = true} : vector<8x1xf32> -> vector<8x1xf32>
    %48 = arith.mulf %46, %47 : vector<8x1xf32>
    %cst_9 = arith.constant 2.000000e+00 : f32
    %49 = vector.broadcast %cst_9 : f32 to vector<8x1xf32>
    %50 = arith.subf %49, %48 : vector<8x1xf32>
    %51 = arith.mulf %47, %50 : vector<8x1xf32>
    %52 = vector.broadcast %51 : vector<8x1xf32> to vector<8x128xf32>
    %53 = arith.mulf %44, %52 : vector<8x128xf32>
    %c2_i32_10 = arith.constant 2 : i32
    %54 = vector.broadcast %c2_i32_10 : i32 to vector<8x128xi32>
    %55 = arith.cmpi eq, %35, %54 : vector<8x128xi32>
    %cst_11 = arith.constant 0.000000e+00 : f32
    %56 = vector.broadcast %cst_11 : f32 to vector<8x128xf32>
    %57 = arith.select %55, %34, %56 : vector<8x128xi1>, vector<8x128xf32>
    %58 = arith.addf %53, %57 : vector<8x128xf32>
    %c0_12 = arith.constant 0 : index
    %c0_13 = arith.constant 0 : index
    %59 = vector.load %arg4[%c0_12, %c0_13] : memref<8x128xf32, #tpu.memory_space<vmem>>, vector<8x128xf32>
    tpu.vector_store %arg4[%c0_12, %c0_13], %58 {strides = array<i32>} : memref<8x128xf32, #tpu.memory_space<vmem>>, vector<8x128xf32>,
    return
  }
  func.func @transform_0(%arg0: i32) -> (i32, i32) {
    %c0_i32 = arith.constant 0 : i32
    %c0_i32_0 = arith.constant 0 : i32
    return %arg0, %c0_i32 : i32, i32
  }
  func.func @transform_1(%arg0: i32) -> (i32, i32) {
    %c0_i32 = arith.constant 0 : i32
    %c0_i32_0 = arith.constant 0 : i32
    %c0_i32_1 = arith.constant 0 : i32
    return %c0_i32, %c0_i32_0 : i32, i32
  }
  func.func @transform_2(%arg0: i32) -> (i32, i32) {
    %c0_i32 = arith.constant 0 : i32
    %c0_i32_0 = arith.constant 0 : i32
    %c0_i32_1 = arith.constant 0 : i32
    return %c0_i32, %c0_i32_0 : i32, i32
  }
  func.func @transform_3(%arg0: i32) -> (i32, i32) {
    %c0_i32 = arith.constant 0 : i32
    %c0_i32_0 = arith.constant 0 : i32
    return %arg0, %c0_i32 : i32, i32
  }
}

</mosaic_0001>

<llo_original>
// kernel: tpu_custom_call.1
$region0: #{tpu_custom_call.1}
  #allocation0 [shape = 'u32[]', space=smem, size = 0x4, offset = 0x4, fixed_abs, tag = 'smem constant byte address 0x4 - core index']
  #allocation1 [shape = 'u32[144,128]{1,0:T(1,128)}', space=vmem, size = 0x12000, scoped, tag = 'internal scratch']
  %s0 = inlined_call_operand.vmem [shape: f32[8,4], index: 0, kind: input, shape index: {}]
  %s1 = inlined_call_operand.vmem [shape: f32[8,128], index: 1, kind: input, shape index: {}]
  %s2 = inlined_call_operand.hbm [shape: f32[128,128], index: 2, kind: input, shape index: {}]
  %s3 = inlined_call_operand.hbm [shape: f32[8,128], index: 3, kind: output, shape index: {}]
  %s4 = sld [smem:[#allocation0]]
  $region26: #{tpu_custom_call.1} parent=0
    _
  %s6 = ssub.s32 1, %s4
  %s7 = scalar_select 0, %s6, %s4
  $region1: #{tpu_custom_call.1} parent=0
    #allocation2 [shape = 'u8[65536]{0}', space=vmem, size = 0x10000, scoped, tag = 'input window, operand 2, single buffered']
    #allocation3 [shape = 's32[1]{0}', space=sflag, size = 0x4, scoped, tag = 'scoped memory for tpu_custom_call.1']
    #allocation4 [shape = 's32[1]{0}', space=sflag, size = 0x4, scoped, tag = 'scoped memory for tpu_custom_call.1']
    #allocation5 [shape = 'u8[4096]{0}', space=vmem, size = 0x1000, scoped, tag = 'output window, operand 0, single buffered']
    %8 = vsyncpa [#allocation3], 0
    %9 = vsyncpa [#allocation4], 0
    // Predicated region
    $region2: #{tpu_custom_call.1} parent=1 // pred_check
      _
    $region3: #{tpu_custom_call.1} parent=1 // pred_check_branch
      %11 = sbr.rel (0) target = $region5
    $region4: #{tpu_custom_call.1} parent=1 // pred_region
      _
    $region5: #{tpu_custom_call.1} parent=1 // pred_fallthru
      _
    // Predicated region
    $region6: #{tpu_custom_call.1} parent=1 // pred_check
      _
    $region7: #{tpu_custom_call.1} parent=1 // pred_check_branch
      %13 = sbr.rel (0) target = $region9
    $region8: #{tpu_custom_call.1} parent=1 // pred_region
      _
    $region9: #{tpu_custom_call.1} parent=1 // pred_fallthru
      _
    // Predicated region
    $region10: #{tpu_custom_call.1} parent=1 // pred_check
      _
    $region11: #{tpu_custom_call.1} parent=1 // pred_check_branch
      %15 = sbr.rel (0) target = $region13
    $region12: #{tpu_custom_call.1} parent=1 // pred_region
      %s17 = ssub.s32 2048, 2048
      %18 = vsyncadd [#allocation3], %s17
      %s19 = sshll.u32 [#allocation2], 4
      %s20 = int_to_ptr.vmem [resolvable:$true] %s19
      %25 = dma.hbm_to_vmem [thread:$0]  %s2, 2048, %s20, [#allocation3], 128, 128, 8
    $region13: #{tpu_custom_call.1} parent=1 // pred_fallthru
      _
    // Predicated region
    $region14: #{tpu_custom_call.1} parent=1 // pred_check
      _
    $region15: #{tpu_custom_call.1} parent=1 // pred_check_branch
      %27 = sbr.rel (0) target = $region17
    $region16: #{tpu_custom_call.1} parent=1 // pred_region
      %28 = dma.done [#allocation3], 2048
    $region17: #{tpu_custom_call.1} parent=1 // pred_fallthru
      _
    %v29 = vld [vmem:[%s0] sm:$0xff]
    %v30 = vld [vmem:[%s1] sm:$0xff]
    %32 = vset.pattern.permute.xlu0 0
    %33 = vperm.xlu0 %32, %v29
    %v34 = vpop.permute.xlu0 %33
    %v36 = vlaneseq
    %v37 = vshrl.u32 %v36, 7
    %v38 = vsub.s32 0, %v37
    %v39 = vrot.slane %v30, %v38
    %v40 = vmul.f32 %v34, %v39
    %v41 = vlaneseq
    %v42 = vshrl.u32 %v41, 7
    %v43 = vsub.s32 4, %v42
    %v44 = vrot.slane %v30, %v43
    %v45 = vadd.f32 %v44, %v40
    %46 = vset.pattern.permute.xlu0 1
    %47 = vperm.xlu0 %46, %v29
    %v48 = vpop.permute.xlu0 %47
    %v50 = vlaneseq
    %v51 = vshrl.u32 %v50, 7
    %v52 = vsub.s32 1, %v51
    %v53 = vrot.slane %v30, %v52
    %v54 = vmul.f32 %v48, %v53
    %v55 = vadd.f32 %v45, %v54
    %56 = vset.pattern.permute.xlu0 2
    %57 = vperm.xlu0 %56, %v29
    %v58 = vpop.permute.xlu0 %57
    %v60 = vlaneseq
    %v61 = vshrl.u32 %v60, 7
    %v62 = vsub.s32 2, %v61
    %v63 = vrot.slane %v30, %v62
    %v64 = vmul.f32 %v58, %v63
    %v65 = vadd.f32 %v55, %v64
    %66 = vset.pattern.permute.xlu0 3
    %67 = vperm.xlu0 %66, %v29
    %v68 = vpop.permute.xlu0 %67
    %v70 = vlaneseq
    %v71 = vshrl.u32 %v70, 7
    %v72 = vsub.s32 3, %v71
    %v73 = vrot.slane %v30, %v72
    %v74 = vmul.f32 %v68, %v73
    %v75 = vadd.f32 %v65, %v74
    %v76 = vmax.f32 %v75, 0.0
    %v77 = vld [vmem:[#allocation2] sm:$0xff]
    %v78 = vld [vmem:[#allocation2 + $0x8] sm:$0xff]
    %v79 = vld [vmem:[#allocation2 + $0x10] sm:$0xff]
    %v80 = vld [vmem:[#allocation2 + $0x18] sm:$0xff]
    %v81 = vld [vmem:[#allocation2 + $0x20] sm:$0xff]
    %v82 = vld [vmem:[#allocation2 + $0x28] sm:$0xff]
    %v83 = vld [vmem:[#allocation2 + $0x30] sm:$0xff]
    %v84 = vld [vmem:[#allocation2 + $0x38] sm:$0xff]
    %v85 = vld [vmem:[#allocation2 + $0x40] sm:$0xff]
    %v86 = vld [vmem:[#allocation2 + $0x48] sm:$0xff]
    %v87 = vld [vmem:[#allocation2 + $0x50] sm:$0xff]
    %v88 = vld [vmem:[#allocation2 + $0x58] sm:$0xff]
    %v89 = vld [vmem:[#allocation2 + $0x60] sm:$0xff]
    %v90 = vld [vmem:[#allocation2 + $0x68] sm:$0xff]
    %v91 = vld [vmem:[#allocation2 + $0x70] sm:$0xff]
    %v92 = vld [vmem:[#allocation2 + $0x78] sm:$0xff]
    %v93 = vlaneseq
    %v94 = vshrl.u32 %v93, 7
    %v95 = vsub.s32 5, %v94
    %v96 = vrot.slane %v30, %v95
    %97 = vmatprep.subr.mxu0 0.0
    %98 = vmatpush1.msra.mxu0 %v77
    %99 = vmatprep.subr.mxu0 0.0
    %100 = vmatpush1.msra.mxu0 %v78
    %101 = vmatprep.subr.mxu0 0.0
    %102 = vmatpush1.msra.mxu0 %v79
    %103 = vmatprep.subr.mxu0 0.0
    %104 = vmatpush1.msra.mxu0 %v80
    %105 = vmatprep.subr.mxu0 0.0
    %106 = vmatpush1.msra.mxu0 %v81
    %107 = vmatprep.subr.mxu0 0.0
    %108 = vmatpush1.msra.mxu0 %v82
    %109 = vmatprep.subr.mxu0 0.0
    %110 = vmatpush1.msra.mxu0 %v83
    %111 = vmatprep.subr.mxu0 0.0
    %112 = vmatpush1.msra.mxu0 %v84
    %113 = vmatprep.subr.mxu0 0.0
    %114 = vmatpush1.msra.mxu0 %v85
    %115 = vmatprep.subr.mxu0 0.0
    %116 = vmatpush1.msra.mxu0 %v86
    %117 = vmatprep.subr.mxu0 0.0
    %118 = vmatpush1.msra.mxu0 %v87
    %119 = vmatprep.subr.mxu0 0.0
    %120 = vmatpush1.msra.mxu0 %v88
    %121 = vmatprep.subr.mxu0 0.0
    %122 = vmatpush1.msra.mxu0 %v89
    %123 = vmatprep.subr.mxu0 0.0
    %124 = vmatpush1.msra.mxu0 %v90
    %125 = vmatprep.subr.mxu0 0.0
    %126 = vmatpush1.msra.mxu0 %v91
    %127 = vmatprep.subr.mxu0 0.0
    %128 = vmatpush1.msra.mxu0 %v92
    %129 = vmatprep.subr.mxu0 0.0
    %130 = vmatpush1.msra.mxu0 0.0
    %131 = vmatprep.subr.mxu0 0.0
    %132 = vmatpush1.msra.mxu0 0.0
    %133 = vmatprep.subr.mxu0 0.0
    %134 = vmatpush1.msra.mxu0 0.0
    %135 = vmatprep.subr.mxu0 0.0
    %136 = vmatpush1.msra.mxu0 0.0
    %137 = vmatprep.subr.mxu0 0.0
    %138 = vmatpush1.msra.mxu0 0.0
    %139 = vmatprep.subr.mxu0 0.0
    %140 = vmatpush1.msra.mxu0 0.0
    %141 = vmatprep.subr.mxu0 0.0
    %142 = vmatpush1.msra.mxu0 0.0
    %143 = vmatprep.subr.mxu0 0.0
    %144 = vmatpush1.msra.mxu0 0.0
    %145 = vmatprep.subr.mxu0 0.0
    %146 = vmatpush1.msra.mxu0 0.0
    %147 = vmatprep.subr.mxu0 0.0
    %148 = vmatpush1.msra.mxu0 0.0
    %149 = vmatprep.subr.mxu0 0.0
    %150 = vmatpush1.msra.mxu0 0.0
    %151 = vmatprep.subr.mxu0 0.0
    %152 = vmatpush1.msra.mxu0 0.0
    %153 = vmatprep.subr.mxu0 0.0
    %154 = vmatpush1.msra.mxu0 0.0
    %155 = vmatprep.subr.mxu0 0.0
    %156 = vmatpush1.msra.mxu0 0.0
    %157 = vmatprep.subr.mxu0 0.0
    %158 = vmatpush1.msra.mxu0 0.0
    %159 = vmatprep.subr.mxu0 0.0
    %160 = vmatpush1.msra.mxu0 0.0
    %161 = vmatprep.mubr.f32.mxu0 0.0
    %162 = vmatmul.mubr.f32.gmra.mrb[0].mxu0 %v76
    %v163 = vpop.f32.mrb[0].mxu0
    %v164 = vadd.f32 %v96, %v163
    %v165 = vpop.f32.mrb[0].mxu0
    %166 = vdwg.mxu0
    %v167 = vlaneseq
    %v168 = vand.u32 %v167, 127
    %vm169 = vcmp.lt.s32.totalorder %v168, 2
    %v170 = vsel %vm169, %v164, -1e+30
    %171 = vmax.xlane.f32.xlu0 %v170
    %v172 = vpop.xlane.xlu0 %171
    %v173 = vsub.f32 %v170, %v172
    %v174 = vmul.f32 %v173, 1.442695
    %v175 = vpow.pop %v174
    %176 = vadd.xlane.f32.xlu0 %v175
    %v177 = vpop.xlane.xlu0 %176
    %v178 = vrcp.pop %v177
    %v179 = vmul.f32 %v177, %v178
    %v180 = vsub.f32 2.0, %v179
    %v181 = vmul.f32 %v178, %v180
    %v182 = vmul.f32 %v175, %v181
    %vm183 = vcmp.eq.s32.totalorder %v168, 2
    %v184 = vsel %vm183, %v164, 0.0
    %v185 = vadd.f32 %v182, %v184
    %186 = vst [vmem:[#allocation5] sm:$0xff] %v185
    // Predicated region
    $region18: #{tpu_custom_call.1} parent=1 // pred_check
      _
    $region19: #{tpu_custom_call.1} parent=1 // pred_check_branch
      %188 = sbr.rel (0) target = $region21
    $region20: #{tpu_custom_call.1} parent=1 // pred_region
      %s190 = ssub.s32 128, 128
      %191 = vsyncadd [#allocation4], %s190
      %s193 = sshll.u32 [#allocation5], 4
      %s194 = int_to_ptr.vmem [resolvable:$true] %s193
      %196 = dma.vmem_to_hbm [thread:$0]  %s194, 128, %s3, [#allocation4]
    $region21: #{tpu_custom_call.1} parent=1 // pred_fallthru
      _
    // Predicated region
    $region22: #{tpu_custom_call.1} parent=1 // pred_check
      _
    $region23: #{tpu_custom_call.1} parent=1 // pred_check_branch
      %198 = sbr.rel (0) target = $region25
    $region24: #{tpu_custom_call.1} parent=1 // pred_region
      %199 = dma.done [#allocation4], 128
    $region25: #{tpu_custom_call.1} parent=1 // pred_fallthru
      _
    %200 = vsyncpa [#allocation3], 1
    %201 = vsyncpa [#allocation4], 1

</llo_original>
